<compile_context>
chip_gen: v5e
topology: v5e:2x2
jax: 0.10.0
libtpu: 0.0.40
codegen_flags: <defaults>
</compile_context>

<pallas_src>
import jax
import jax.numpy as jnp
from jax import lax
from jax.experimental import pallas as pl
from jax.experimental.pallas import tpu as pltpu


def _patch_embed_matmul_kernel(p_ref, w_ref, b_ref, o_ref):
    # p_ref: [TM, K] bf16 im2col patches, w_ref: [K, Np] bf16 weight,
    # b_ref: [1, Np] f32 bias, o_ref: [TM, Np] bf16 projected tokens.
    acc = jnp.dot(p_ref[...], w_ref[...], preferred_element_type=jnp.float32)
    o_ref[...] = (acc + b_ref[...]).astype(o_ref.dtype)


def _im2col_nhwc_bf16(x_nchw, kernel, stride, padding):
    """x: [B, C, H, W] f32 -> bf16 patches [B*Ho*Wo, KH*KW*C], (kh, kw, c) order."""
    B, C, H, W = x_nchw.shape
    KH, KW = kernel
    SH, SW = stride
    PH, PW = padding
    Ho = (H + 2 * PH - KH) // SH + 1
    Wo = (W + 2 * PW - KW) // SW + 1

    # NHWC + bf16 up front: the 49 slices / concat / pad all run on half bytes.
    x = jnp.transpose(x_nchw, (0, 2, 3, 1)).astype(jnp.bfloat16)
    xp = jnp.pad(x, ((0, 0), (PH, PH), (PW, PW), (0, 0)))

    slices = []
    for kh in range(KH):
        for kw in range(KW):
            s = xp[:, kh: kh + (Ho - 1) * SH + 1: SH,
                      kw: kw + (Wo - 1) * SW + 1: SW, :]     # [B, Ho, Wo, C]
            slices.append(s)
    patches = jnp.concatenate(slices, axis=-1)               # [B, Ho, Wo, KH*KW*C]
    patches = patches.reshape(B * Ho * Wo, KH * KW * C)
    return patches, (Ho, Wo)


def _vmem_footprint_bytes(tm, K, Np):
    # patches (bf16, double-buffered) + out (bf16, double-buffered)
    # + weight (bf16, single buffer) + bias (f32, single buffer)
    return 2 * tm * K * 2 + 2 * tm * Np * 2 + K * Np * 2 + Np * 4


def _pick_tile_m(M, cap):
    """Largest TM <= cap that is a multiple of 16, preferring exact divisors of M."""
    cap16 = (min(cap, M) // 16) * 16
    for tm in range(cap16, 0, -16):
        if M % tm == 0:
            # Avoid a single mega-tile when M is large so the "parallel" M axis
            # gives both v7x TensorCores work.
            if tm == M and M >= 4096:
                continue
            return tm, True
    # No suitable divisor: round up to a multiple of 16 and pad rows with zeros.
    tm = min(max(cap16, 16), ((M + 15) // 16) * 16)
    return tm, False


def patch_embed_forward(x, weight, bias, *, kernel=(7, 7), stride=(4, 4),
                        padding=(3, 3), tile_m=4096):
    """
    x:      [B, C, H, W]   (NCHW, like PyTorch)
    weight: [dim_out, C, KH, KW]
    bias:   [dim_out]
    returns (tokens [B, Ho*Wo, dim_out] bf16, conv shape tuple (B, dim_out, Ho, Wo))
    """
    B, C, H, W = x.shape
    dim_out = weight.shape[0]
    KH, KW = kernel

    patches, (Ho, Wo) = _im2col_nhwc_bf16(x, kernel, stride, padding)  # [M, K] bf16
    M, K = patches.shape

    # Lane-dense output: pad N up to a multiple of 128 (sliced off afterwards).
    Np = ((dim_out + 127) // 128) * 128

    # Weight permuted to (kh, kw, c) feature order to match the NHWC im2col,
    # then padded along N. (Tiny tensor — essentially free.)
    w2d = jnp.transpose(weight, (2, 3, 1, 0)).reshape(K, dim_out)
    w2d = jnp.pad(w2d, ((0, 0), (0, Np - dim_out))).astype(jnp.bfloat16)
    b2d = jnp.pad(bias, (0, Np - dim_out)).reshape(1, Np).astype(jnp.float32)

    # Shrink the TM cap if the double-buffered footprint would crowd v7x's
    # 64 MiB VMEM; then pick the actual tile.
    budget = 40 * 1024 * 1024
    cap = max(16, tile_m)
    while cap > 64 and _vmem_footprint_bytes(cap, K, Np) > budget:
        cap //= 2
    TM, exact = _pick_tile_m(M, cap)
    num_tiles = pl.cdiv(M, TM)
    Mp = num_tiles * TM

    patches_b = patches
    if Mp != M:
        patches_b = jnp.pad(patches_b, ((0, Mp - M), (0, 0)))

    vmem_limit = min(
        max(int(1.5 * _vmem_footprint_bytes(TM, K, Np)) + (2 << 20), 16 << 20),
        56 << 20,
    )

    cost = pl.CostEstimate(
        flops=2 * M * K * dim_out,
        transcendentals=0,
        bytes_accessed=M * K * 2 + K * Np * 2 + Np * 4 + M * Np * 2,
    )

    out = pl.pallas_call(
        _patch_embed_matmul_kernel,
        out_shape=jax.ShapeDtypeStruct((Mp, Np), jnp.bfloat16),
        grid=(num_tiles,),
        in_specs=[
            # patches tile: pipelined (double-buffered by default)
            pl.BlockSpec((TM, K), lambda i: (i, 0)),
            # weight / bias: constant index_map -> single buffer, VMEM-resident
            pl.BlockSpec((K, Np), lambda i: (0, 0), pipeline_mode=pl.Buffered(1)),
            pl.BlockSpec((1, Np), lambda i: (0, 0), pipeline_mode=pl.Buffered(1)),
        ],
        out_specs=pl.BlockSpec((TM, Np), lambda i: (i, 0)),
        compiler_params=pltpu.CompilerParams(
            dimension_semantics=("parallel",),
            vmem_limit_bytes=vmem_limit,
        ),
        cost_estimate=cost,
    )(patches_b, w2d, b2d)

    # Row slice is a no-op whenever TM divides M; column slice is a no-op when
    # dim_out is already a multiple of 128 (e.g. the default 768).
    tokens = out[:M, :dim_out].reshape(B, Ho * Wo, dim_out)
    conv_shape = (B, dim_out, Ho, Wo)
    return tokens, conv_shape


if __name__ == "__main__":
    key = jax.random.PRNGKey(0)
    kx, kw, kb = jax.random.split(key, 3)

    # Small, forward-consistent shapes: B=2, C=3 (Conv2d dim_in default), H=W=16, dim_out=32.
    B, C, H, W = 2, 3, 16, 16
    dim_out = 32
    kernel, stride, padding = (7, 7), (4, 4), (3, 3)

    x = jax.random.normal(kx, (B, C, H, W), dtype=jnp.float32)
    weight = 0.02 * jax.random.normal(kw, (dim_out, C, *kernel), dtype=jnp.float32)
    bias = 0.02 * jax.random.normal(kb, (dim_out,), dtype=jnp.float32)

    tokens, conv_shape = patch_embed_forward(
        x, weight, bias, kernel=kernel, stride=stride, padding=padding)
    tokens = jax.block_until_ready(tokens)

    # Reference check against XLA conv (same semantics as nn.Conv2d forward).
    ref_conv = lax.conv_general_dilated(
        x, weight, window_strides=stride,
        padding=[(padding[0], padding[0]), (padding[1], padding[1])],
        dimension_numbers=("NCHW", "OIHW", "NCHW"),
        precision=lax.Precision.HIGHEST) + bias[None, :, None, None]
    ref_tokens = jnp.transpose(ref_conv.reshape(B, dim_out, -1), (0, 2, 1))

    assert conv_shape == tuple(ref_conv.shape), (conv_shape, ref_conv.shape)
    # bf16 operands/output with f32 accumulation -> loosened tolerance vs f32 ref.
    tokens_f32 = tokens.astype(jnp.float32)
    max_err = float(jnp.max(jnp.abs(tokens_f32 - ref_tokens)))
    assert jnp.allclose(tokens_f32, ref_tokens, atol=5e-2, rtol=5e-2), max_err

    print("KERNEL_OK")
</pallas_src>

<mosaic_0001>
module attributes {stable_mosaic.version = 11 : i64} {
  func.func @_patch_embed_matmul_kernel(%arg0: i32, %arg1: memref<32x147xbf16, #tpu.memory_space<vmem>>, %arg2: memref<147x128xbf16, #tpu.memory_space<vmem>>, %arg3: memref<1x128xf32, #tpu.memory_space<vmem>>, %arg4: memref<32x128xbf16, #tpu.memory_space<vmem>>) attributes {dimension_semantics = [#tpu.dimension_semantics<parallel>], iteration_bounds = array<i64: 1>, scalar_prefetch = 0 : i64, scratch_operands = 0 : i64, tpu.core_type = #tpu.core_type<tc>, window_params = [{transform_indices = @transform_0, window_bounds = array<i64: 32, 147>}, {pipeline_mode = #tpu.pipeline_mode<synchronous>, transform_indices = @transform_1, window_bounds = array<i64: 147, 128>}, {pipeline_mode = #tpu.pipeline_mode<synchronous>, transform_indices = @transform_2, window_bounds = array<i64: 1, 128>}, {transform_indices = @transform_3, window_bounds = array<i64: 32, 128>}]} {
    %c0 = arith.constant 0 : index
    %c0_0 = arith.constant 0 : index
    %0 = vector.load %arg1[%c0, %c0_0] : memref<32x147xbf16, #tpu.memory_space<vmem>>, vector<32x147xbf16>
    %c0_1 = arith.constant 0 : index
    %c0_2 = arith.constant 0 : index
    %1 = vector.load %arg2[%c0_1, %c0_2] : memref<147x128xbf16, #tpu.memory_space<vmem>>, vector<147x128xbf16>
    %cst = arith.constant dense<0.000000e+00> : vector<32x128xf32>
    %2 = tpu.matmul %0, %1, %cst {dimension_numbers = #tpu.dot_dimension_numbers<[1], [0], [0], [1], [0, 0, 1, 1], [], []>} : vector<32x147xbf16>, vector<147x128xbf16>, vector<32x128xf32> -> vector<32x128xf32>
    %c0_3 = arith.constant 0 : index
    %c0_4 = arith.constant 0 : index
    %3 = vector.load %arg3[%c0_3, %c0_4] : memref<1x128xf32, #tpu.memory_space<vmem>>, vector<1x128xf32>
    %4 = vector.broadcast %3 : vector<1x128xf32> to vector<32x128xf32>
    %5 = arith.addf %2, %4 : vector<32x128xf32>
    %6 = arith.truncf %5 : vector<32x128xf32> to vector<32x128xbf16>
    %c0_5 = arith.constant 0 : index
    %c0_6 = arith.constant 0 : index
    %7 = vector.load %arg4[%c0_5, %c0_6] : memref<32x128xbf16, #tpu.memory_space<vmem>>, vector<32x128xbf16>
    tpu.vector_store %arg4[%c0_5, %c0_6], %6 {strides = array<i32>} : memref<32x128xbf16, #tpu.memory_space<vmem>>, vector<32x128xbf16>,
    return
  }
  func.func @transform_0(%arg0: i32) -> (i32, i32) {
    %c0_i32 = arith.constant 0 : i32
    %c0_i32_0 = arith.constant 0 : i32
    return %arg0, %c0_i32 : i32, i32
  }
  func.func @transform_1(%arg0: i32) -> (i32, i32) {
    %c0_i32 = arith.constant 0 : i32
    %c0_i32_0 = arith.constant 0 : i32
    %c0_i32_1 = arith.constant 0 : i32
    return %c0_i32, %c0_i32_0 : i32, i32
  }
  func.func @transform_2(%arg0: i32) -> (i32, i32) {
    %c0_i32 = arith.constant 0 : i32
    %c0_i32_0 = arith.constant 0 : i32
    %c0_i32_1 = arith.constant 0 : i32
    return %c0_i32, %c0_i32_0 : i32, i32
  }
  func.func @transform_3(%arg0: i32) -> (i32, i32) {
    %c0_i32 = arith.constant 0 : i32
    %c0_i32_0 = arith.constant 0 : i32
    return %arg0, %c0_i32 : i32, i32
  }
}

</mosaic_0001>

<llo_original>
// kernel: tpu_custom_call.1
$region0: #{tpu_custom_call.1}
  #allocation0 [shape = 'u32[]', space=smem, size = 0x4, offset = 0x4, fixed_abs, tag = 'smem constant byte address 0x4 - core index']
  #allocation1 [shape = 'u32[72,128]{1,0:T(1,128)}', space=vmem, size = 0x9000, scoped, tag = 'internal scratch']
  %s0 = inlined_call_operand.hbm [shape: bf16[32,147], index: 0, kind: input, shape index: {}]
  %s1 = inlined_call_operand.hbm [shape: bf16[147,128], index: 1, kind: input, shape index: {}]
  %s2 = inlined_call_operand.vmem [shape: f32[1,128], index: 2, kind: input, shape index: {}]
  %s3 = inlined_call_operand.hbm [shape: bf16[32,128], index: 3, kind: output, shape index: {}]
  %s4 = sld [smem:[#allocation0]]
  $region30: #{tpu_custom_call.1} parent=0
    _
  %s6 = ssub.s32 1, %s4
  %s7 = scalar_select 0, %s6, %s4
  $region1: #{tpu_custom_call.1} parent=0
    #allocation2 [shape = 'u8[16384]{0}', space=vmem, size = 0x4000, scoped, tag = 'input window, operand 0, single buffered']
    #allocation3 [shape = 's32[1]{0}', space=sflag, size = 0x4, scoped, tag = 'scoped memory for tpu_custom_call.1']
    #allocation4 [shape = 's32[1]{0}', space=sflag, size = 0x4, scoped, tag = 'scoped memory for tpu_custom_call.1']
    #allocation5 [shape = 'u8[38912]{0}', space=vmem, size = 0x9800, scoped, tag = 'input window, operand 1, single buffered']
    #allocation6 [shape = 's32[1]{0}', space=sflag, size = 0x4, scoped, tag = 'scoped memory for tpu_custom_call.1']
    #allocation7 [shape = 'u8[8192]{0}', space=vmem, size = 0x2000, scoped, tag = 'output window, operand 0, single buffered']
    %8 = vsyncpa [#allocation3], 0
    %9 = vsyncpa [#allocation6], 0
    %10 = vsyncpa [#allocation4], 0
    // Predicated region
    $region2: #{tpu_custom_call.1} parent=1 // pred_check
      _
    $region3: #{tpu_custom_call.1} parent=1 // pred_check_branch
      %12 = sbr.rel (0) target = $region5
    $region4: #{tpu_custom_call.1} parent=1 // pred_region
      %14 = vsyncadd [#allocation3], 0
      %s15 = sshll.u32 %s0, 4
      %s16 = int_to_ptr.hbm [resolvable:$true] %s15
      %s17 = sshll.u32 [#allocation2], 4
      %s18 = int_to_ptr.vmem [resolvable:$true] %s17
      %23 = dma.hbm_to_vmem [thread:$0]  %s16, 512, %s18, [#allocation3], 128, 128, 8
    $region5: #{tpu_custom_call.1} parent=1 // pred_fallthru
      _
    // Predicated region
    $region6: #{tpu_custom_call.1} parent=1 // pred_check
      _
    $region7: #{tpu_custom_call.1} parent=1 // pred_check_branch
      %25 = sbr.rel (0) target = $region9
    $region8: #{tpu_custom_call.1} parent=1 // pred_region
      %27 = vsyncadd [#allocation6], 0
      %s28 = sshll.u32 %s1, 4
      %s29 = int_to_ptr.hbm [resolvable:$true] %s28
      %s30 = sshll.u32 [#allocation5], 4
      %s31 = int_to_ptr.vmem [resolvable:$true] %s30
      %36 = dma.hbm_to_vmem [thread:$0]  %s29, 1216, %s31, [#allocation6], 64, 64, 4
    $region9: #{tpu_custom_call.1} parent=1 // pred_fallthru
      _
    // Predicated region
    $region10: #{tpu_custom_call.1} parent=1 // pred_check
      _
    $region11: #{tpu_custom_call.1} parent=1 // pred_check_branch
      %38 = sbr.rel (0) target = $region13
    $region12: #{tpu_custom_call.1} parent=1 // pred_region
      _
    $region13: #{tpu_custom_call.1} parent=1 // pred_fallthru
      _
    // Predicated region
    $region14: #{tpu_custom_call.1} parent=1 // pred_check
      _
    $region15: #{tpu_custom_call.1} parent=1 // pred_check_branch
      %40 = sbr.rel (0) target = $region17
    $region16: #{tpu_custom_call.1} parent=1 // pred_region
      %42 = dma.done [#allocation3], 512
    $region17: #{tpu_custom_call.1} parent=1 // pred_fallthru
      _
    // Predicated region
    $region18: #{tpu_custom_call.1} parent=1 // pred_check
      _
    $region19: #{tpu_custom_call.1} parent=1 // pred_check_branch
      %44 = sbr.rel (0) target = $region21
    $region20: #{tpu_custom_call.1} parent=1 // pred_region
      %46 = dma.done [#allocation6], 1216
    $region21: #{tpu_custom_call.1} parent=1 // pred_fallthru
      _
    %v48 = vld [vmem:[#allocation2] sm:$0xff]
    %v49 = vld [vmem:[#allocation2 + $0x8] sm:$0xff]
    %v50 = vld [vmem:[#allocation2 + $0x10] sm:$0xff]
    %v51 = vld [vmem:[#allocation2 + $0x18] sm:$0xff]
    %v52 = vld [vmem:[#allocation5] sm:$0xf]
    %v53 = vld [vmem:[#allocation5 + $0x4] sm:$0xf]
    %v54 = vld [vmem:[#allocation5 + $0x8] sm:$0xf]
    %v55 = vld [vmem:[#allocation5 + $0xc] sm:$0xf]
    %v56 = vld [vmem:[#allocation5 + $0x10] sm:$0xf]
    %v57 = vld [vmem:[#allocation5 + $0x14] sm:$0xf]
    %v58 = vld [vmem:[#allocation5 + $0x18] sm:$0xf]
    %v59 = vld [vmem:[#allocation5 + $0x1c] sm:$0xf]
    %v60 = vld [vmem:[#allocation5 + $0x20] sm:$0xf]
    %v61 = vld [vmem:[#allocation5 + $0x24] sm:$0xf]
    %v62 = vld [vmem:[#allocation5 + $0x28] sm:$0xf]
    %v63 = vld [vmem:[#allocation5 + $0x2c] sm:$0xf]
    %v64 = vld [vmem:[#allocation5 + $0x30] sm:$0xf]
    %v65 = vld [vmem:[#allocation5 + $0x34] sm:$0xf]
    %v66 = vld [vmem:[#allocation5 + $0x38] sm:$0xf]
    %v67 = vld [vmem:[#allocation5 + $0x3c] sm:$0xf]
    %v68 = vld [vmem:[#allocation5 + $0x40] sm:$0xf]
    %v69 = vld [vmem:[#allocation5 + $0x44] sm:$0xf]
    %v70 = vld [vmem:[#allocation5 + $0x48] sm:$0x3]
    %v71 = vld [vmem:[%s2] sm:$0x1]
    %v73 = vperm.slane %v71, 0
    %v79 = vunpack.c.l.b16 %v48
    %v80 = vunpack.c.h.b16 %v48
    %v81 = vunpack.c.l.b16 %v49
    %v82 = vunpack.c.h.b16 %v49
    %v83 = vunpack.c.l.b16 %v50
    %v84 = vunpack.c.h.b16 %v50
    %v85 = vunpack.c.l.b16 %v51
    %v86 = vunpack.c.h.b16 %v51
    %v87 = vpack.c.b16 %v81, %v79
    %v88 = vpack.c.b16 %v82, %v80
    %v89 = vpack.c.b16 %v85, %v83
    %v90 = vpack.c.b16 %v86, %v84
    %v112 = vunpack.c.l.b16 %v52
    %v113 = vunpack.c.l.b16 %v53
    %v114 = vunpack.c.l.b16 %v54
    %v115 = vunpack.c.l.b16 %v55
    %v116 = vunpack.c.l.b16 %v56
    %v117 = vunpack.c.l.b16 %v57
    %v118 = vunpack.c.l.b16 %v58
    %v119 = vunpack.c.l.b16 %v59
    %v120 = vunpack.c.l.b16 %v60
    %v121 = vunpack.c.l.b16 %v61
    %v122 = vunpack.c.l.b16 %v62
    %v123 = vunpack.c.l.b16 %v63
    %v124 = vunpack.c.l.b16 %v64
    %v125 = vunpack.c.l.b16 %v65
    %v126 = vunpack.c.l.b16 %v66
    %v127 = vunpack.c.l.b16 %v67
    %v128 = vunpack.c.l.b16 %v68
    %v129 = vunpack.c.l.b16 %v69
    %v130 = vunpack.c.l.b16 %v70
    %v131 = vpack.c.b16 %v113, %v112
    %v132 = vpack.c.b16 %v115, %v114
    %v133 = vpack.c.b16 %v117, %v116
    %v134 = vpack.c.b16 %v119, %v118
    %v135 = vpack.c.b16 %v121, %v120
    %v136 = vpack.c.b16 %v123, %v122
    %v137 = vpack.c.b16 %v125, %v124
    %v138 = vpack.c.b16 %v127, %v126
    %v139 = vpack.c.b16 %v129, %v128
    %v140 = vpack.c.b16 %v130, %v130
    %vm150 = vcmask 154624
    %v152 = vsel %vm150, %v88, 0
    %v155 = vsel %vm150, %v90, 0
    %vm157 = vcmask 1040384
    %vm158 = vcmask 1041408
    %v159 = vsel %vm157, 4294967295, 65535
    %v160 = vsel %vm158, %v159, 0
    %v162 = vand.u32 %v140, %v160
    %164 = vmatpush.bf16.msra.mxu0 %v138
    %165 = vmatpush.bf16.msra.mxu0 %v137
    %166 = vmatpush.bf16.msra.mxu0 %v136
    %167 = vmatpush.bf16.msra.mxu0 %v135
    %168 = vmatpush.bf16.msra.mxu0 %v134
    %169 = vmatpush.bf16.msra.mxu0 %v133
    %170 = vmatpush.bf16.msra.mxu0 %v132
    %171 = vmatpush.bf16.msra.mxu0 %v131
    %172 = vmatmul.bf16.gmra.mxu0 %v87
    %v173 = vpop.f32.mrf.mxu0
    %v174 = vadd.f32 %v73, %v173
    %v175 = vpop.f32.mrf.mxu0
    %v176 = vadd.f32 %v73, %v175
    %177 = vmatmul.bf16.gmra.mxu0 %v89
    %v178 = vpop.f32.mrf.mxu0
    %v179 = vadd.f32 %v73, %v178
    %v180 = vpop.f32.mrf.mxu0
    %v181 = vadd.f32 %v73, %v180
    %182 = vdwg.mxu0
    %183 = vmatpush.bf16.msra.mxu0 0
    %184 = vmatpush.bf16.msra.mxu0 0
    %185 = vmatpush.bf16.msra.mxu0 0
    %186 = vmatpush.bf16.msra.mxu0 0
    %187 = vmatpush.bf16.msra.mxu0 0
    %188 = vmatpush.bf16.msra.mxu0 0
    %189 = vmatpush.bf16.msra.mxu0 %v162
    %190 = vmatpush.bf16.msra.mxu0 %v139
    %191 = vmatmul.bf16.gmra.mxu0 %v152
    %v192 = vpop.f32.mrf.mxu0
    %v193 = vadd.f32 %v174, %v192
    %v194 = vpop.f32.mrf.mxu0
    %v195 = vadd.f32 %v176, %v194
    %196 = vmatmul.bf16.gmra.mxu0 %v155
    %v197 = vpop.f32.mrf.mxu0
    %v198 = vadd.f32 %v179, %v197
    %v199 = vpop.f32.mrf.mxu0
    %v200 = vadd.f32 %v181, %v199
    %201 = vdwg.mxu0
    %v202 = vpack.c.bf16 %v193, %v193
    %v203 = vpack.c.bf16 %v195, %v195
    %v204 = vpack.c.bf16 %v198, %v198
    %v205 = vpack.c.bf16 %v200, %v200
    %206 = vst [vmem:[#allocation7] sm:$0xf] %v202
    %207 = vst [vmem:[#allocation7 + $0x4] sm:$0xf] %v203
    %208 = vst [vmem:[#allocation7 + $0x8] sm:$0xf] %v204
    %209 = vst [vmem:[#allocation7 + $0xc] sm:$0xf] %v205
    // Predicated region
    $region22: #{tpu_custom_call.1} parent=1 // pred_check
      _
    $region23: #{tpu_custom_call.1} parent=1 // pred_check_branch
      %211 = sbr.rel (0) target = $region25
    $region24: #{tpu_custom_call.1} parent=1 // pred_region
      %213 = vsyncadd [#allocation4], 0
      %s214 = sshll.u32 [#allocation7], 4
      %s215 = int_to_ptr.vmem [resolvable:$true] %s214
      %s216 = sshll.u32 %s3, 4
      %s217 = int_to_ptr.hbm [resolvable:$true] %s216
      %222 = dma.vmem_to_hbm [thread:$0]  %s215, 256, %s217, [#allocation4], 64, 64, 4
    $region25: #{tpu_custom_call.1} parent=1 // pred_fallthru
      _
    // Predicated region
    $region26: #{tpu_custom_call.1} parent=1 // pred_check
      _
    $region27: #{tpu_custom_call.1} parent=1 // pred_check_branch
      %224 = sbr.rel (0) target = $region29
    $region28: #{tpu_custom_call.1} parent=1 // pred_region
      %226 = dma.done [#allocation4], 256
    $region29: #{tpu_custom_call.1} parent=1 // pred_fallthru
      _
    %227 = vsyncpa [#allocation3], 1
    %228 = vsyncpa [#allocation6], 1
    %229 = vsyncpa [#allocation4], 1

</llo_original>
